<compile_context>
chip_gen: v7x
topology: tpu7x:2x2x1
jax: 0.10.0
libtpu: 0.0.40
codegen_flags: <defaults>
</compile_context>

<pallas_src>
import functools

import jax
import jax.numpy as jnp
from jax import lax
from jax.experimental import pallas as pl
from jax.experimental.pallas import tpu as pltpu

_LANES = 128
_MIN_PALLAS_ELEMS = 16 * 1024          # below this, plain JAX is faster (launch bound)
_VMEM_INPUT_BUDGET = 20 * 1024 * 1024  # double-buffered input tiles budget (bytes)
_VMEM_LIMIT_BYTES = 32 * 1024 * 1024   # scoped VMEM limit requested from Mosaic


def _round_up(x, m):
    return ((x + m - 1) // m) * m


def _chip_params():
    """Per-TPU-generation (max row-tile, #TensorCore grid splits)."""
    try:
        kind = jax.devices()[0].device_kind.lower()
    except Exception:  # pragma: no cover - defensive
        kind = ""
    if "v5" in kind:
        return 2048, 1   # ~820 GB/s HBM: 2048x128 tiles already ~85-90% of roofline
    if "v6" in kind:
        return 4096, 1   # single TensorCore
    if "7" in kind:
        return 8192, 2   # v7x: ~3.2 TB/s HBM, 2 TensorCores, 64 MiB VMEM
    return 2048, 1


def _l1_sum_kernel(*refs, tm, inner, splits, rows_list, nblocks_list, npairs):
    """Accumulate sum(|a_p - b_p|) for `npairs` pairs over a (splits, inner) grid."""
    in_refs = refs[:2 * npairs]
    o_ref = refs[2 * npairs]              # SMEM (1, npairs) partial per core-split
    acc_refs = refs[2 * npairs + 1:]      # npairs x VMEM (8, 128) f32 accumulators

    c = pl.program_id(0)                  # core-split axis ("parallel")
    i = pl.program_id(1)                  # reduction axis ("arbitrary")

    @pl.when(i == 0)
    def _():
        for acc in acc_refs:
            acc[...] = jnp.zeros_like(acc)

    # Global (UNclamped) block index along the row axis for this step.
    blk = c * inner + i

    for p in range(npairs):
        # Upcast in-kernel (cheap VPU op); keeps HBM traffic in native dtype.
        a = in_refs[2 * p][...].astype(jnp.float32)
        b = in_refs[2 * p + 1][...].astype(jnp.float32)
        d = jnp.abs(a - b)                                   # (tm, 128)
        acc = acc_refs[p]
        rows = rows_list[p]
        full = rows // tm                                    # fully valid blocks (static)
        ragged = (rows % tm) != 0
        overhang = splits * inner > nblocks_list[p]

        if not (ragged or overhang):
            # Common path: no masking machinery at all — pure VPU reduce-add
            # into a single-vreg accumulator.
            acc[...] += d.reshape(tm // 8, 8, _LANES).sum(axis=0)
        else:
            if full > 0:
                @pl.when(blk < full)
                def _(d=d, acc=acc):
                    acc[...] += d.reshape(tm // 8, 8, _LANES).sum(axis=0)

            @pl.when(blk >= full)
            def _(d=d, acc=acc, rows=rows):
                # Ragged last block / clamped duplicate block: rows >= `rows`
                # hold unspecified data -> select (not multiply!) them to 0.
                row_ids = blk * tm + lax.broadcasted_iota(jnp.int32, (tm, 1), 0)
                dm = jnp.where(row_ids < rows, d, 0.0)
                acc[...] += dm.reshape(tm // 8, 8, _LANES).sum(axis=0)

    # One tiny (8,128) cross-lane/sublane reduce per pair, last step only.
    @pl.when(i == inner - 1)
    def _():
        for p in range(npairs):
            o_ref[0, p] = jnp.sum(acc_refs[p][...])


def _l1_sums_pallas(pairs2d):
    """Fused sum(|a-b|) for a list of (rows_p, 128) slab pairs. Returns (npairs,) f32."""
    npairs = len(pairs2d)
    rows_list = tuple(int(a.shape[0]) for a, _ in pairs2d)
    max_rows = max(rows_list)

    max_tm, splits = _chip_params()

    # Minimal sublane multiple across all dtypes involved (8 f32 / 16 bf16 / 32 i8).
    sub = 8
    bytes_per_row = 0
    for a, b in pairs2d:
        sub = max(sub, 32 // a.dtype.itemsize, 32 // b.dtype.itemsize)
        bytes_per_row += _LANES * (a.dtype.itemsize + b.dtype.itemsize)
    bytes_per_row *= 2  # double-buffered input tiles

    # Biggest tile that fits the input-buffering VMEM budget and the chip cap.
    budget_rows = max(sub, (int(_VMEM_INPUT_BUDGET // bytes_per_row) // sub) * sub)
    tm = max(sub, min(max_tm, budget_rows, _round_up(max_rows, sub)))

    nblocks_list = tuple(pl.cdiv(r, tm) for r in rows_list)
    max_nblocks = max(nblocks_list)
    splits = min(splits, max_nblocks)          # never a fully wasted duplicate step
    inner = pl.cdiv(max_nblocks, splits)

    in_specs = []
    args = []
    for p, (a2d, b2d) in enumerate(pairs2d):
        nb = nblocks_list[p]
        if splits * inner > nb:
            # Clamp so overhang steps map to a valid block; their rows are
            # masked in-kernel so they contribute 0.
            def imap(c, i, nb=nb):
                return (jnp.minimum(c * inner + i, nb - 1), 0)
        else:
            def imap(c, i):
                return (c * inner + i, 0)
        spec = pl.BlockSpec((tm, _LANES), imap)
        in_specs += [spec, spec]
        args += [a2d, b2d]

    kernel = functools.partial(
        _l1_sum_kernel, tm=tm, inner=inner, splits=splits,
        rows_list=rows_list, nblocks_list=nblocks_list, npairs=npairs)

    # TODO(synk): on v7x, verify the leading "parallel" axis actually shards
    # across the two TensorCores; if not, switch to pltpu.CORE_PARALLEL.
    # TODO(synk): sweep pipeline_mode=pl.Buffered(3) on v7x after tile changes.
    partials = pl.pallas_call(
        kernel,
        out_shape=jax.ShapeDtypeStruct((splits, npairs), jnp.float32),
        grid_spec=pltpu.PrefetchScalarGridSpec(
            num_scalar_prefetch=0,
            grid=(splits, inner),
            in_specs=in_specs,
            out_specs=pl.BlockSpec((1, npairs), lambda c, i: (c, 0),
                                   memory_space=pltpu.MemorySpace.SMEM),
            scratch_shapes=[pltpu.VMEM((8, _LANES), jnp.float32)
                            for _ in range(npairs)],
        ),
        compiler_params=pltpu.CompilerParams(
            dimension_semantics=("parallel", "arbitrary"),
            vmem_limit_bytes=_VMEM_LIMIT_BYTES),
    )(*args)

    return jnp.sum(partials, axis=0)   # (npairs,) totals, one per loss pair


def _prep(x):
    """Flatten to a lane-dense (rows, 128) slab in the ORIGINAL dtype.

    For x.size % 128 == 0 (common NCHW case) this is a free reshape.  Otherwise
    a zero pad is appended — note XLA's pad copies the whole flattened tensor,
    not just the tail.  Both operands are padded identically so the pad
    contributes 0 to |a-b|.
    TODO(synk): replace the ragged-case pad with in-kernel element-granularity
    lane masking of the last block to avoid the extra HBM copy.
    """
    flat = jnp.ravel(x)
    n = flat.shape[0]
    pad = (-n) % _LANES
    if pad:
        flat = jnp.pad(flat, (0, pad))
    return flat.reshape(-1, _LANES)


def _l1_means(pairs):
    """mean(|a-b|) for each (a,b) pair; large pairs fused into ONE pallas_call."""
    results = [None] * len(pairs)
    big = []
    for idx, (a, b) in enumerate(pairs):
        n = int(a.size)
        if n < _MIN_PALLAS_ELEMS:
            # Launch-overhead-bound regime: plain JAX is faster than any kernel.
            results[idx] = jnp.mean(jnp.abs(a.astype(jnp.float32) -
                                            b.astype(jnp.float32)))
        else:
            big.append((idx, _prep(a), _prep(b), n))
    if big:
        totals = _l1_sums_pallas([(a2d, b2d) for _, a2d, b2d, _ in big])
        for j, (idx, _, _, n) in enumerate(big):
            results[idx] = totals[j] / jnp.float32(n)
    return results


class LossWrapper:
    """JAX/Pallas port of models.loss.LossWrapper (forward only)."""

    def __init__(self, use_mm_loss: bool):
        self.use_cl1_loss = use_mm_loss
        self.w = 0.9  # weighting constant from the PyTorch module

    @functools.partial(jax.jit, static_argnums=0)
    def __call__(self, outputs, targets, complement=None, complement_target=None):
        if self.use_cl1_loss:
            # Both L1 reductions run in a single fused pallas_call.
            l1, cl1 = _l1_means([(outputs, targets),
                                 (complement, complement_target)])
            loss = self.w * l1 + (1.0 - self.w) * cl1
            return {"l1_loss": l1, "cl1_loss": cl1, "loss": loss}
        (l1,) = _l1_means([(outputs, targets)])
        return {"l1_loss": l1, "loss": l1}


if __name__ == "__main__":
    key = jax.random.PRNGKey(0)
    k1, k2, k3, k4 = jax.random.split(key, 4)

    # NCHW image-restoration-style tensors, big enough to take the Pallas
    # kernel path (>= _MIN_PALLAS_ELEMS elements), still small (512 KiB each).
    shape = (2, 4, 64, 64)
    outputs = jax.random.normal(k1, shape, dtype=jnp.float32)
    targets = jax.random.normal(k2, shape, dtype=jnp.float32)
    complement = jax.random.normal(k3, shape, dtype=jnp.float32)
    complement_target = jax.random.normal(k4, shape, dtype=jnp.float32)

    # USE_MM_LOSS = True branch (fused dual-pair kernel + weighting).
    wrapper = LossWrapper(use_mm_loss=True)
    result = jax.block_until_ready(
        wrapper(outputs, targets, complement, complement_target))

    ref_l1 = jnp.mean(jnp.abs(outputs - targets))
    ref_cl1 = jnp.mean(jnp.abs(complement - complement_target))
    ref_loss = 0.9 * ref_l1 + 0.1 * ref_cl1
    assert jnp.allclose(result["l1_loss"], ref_l1, rtol=1e-5, atol=1e-6)
    assert jnp.allclose(result["cl1_loss"], ref_cl1, rtol=1e-5, atol=1e-6)
    assert jnp.allclose(result["loss"], ref_loss, rtol=1e-5, atol=1e-6)

    # USE_MM_LOSS = False branch (single-pair kernel).
    wrapper2 = LossWrapper(use_mm_loss=False)
    result2 = jax.block_until_ready(wrapper2(outputs, targets))
    assert jnp.allclose(result2["loss"], ref_l1, rtol=1e-5, atol=1e-6)

    # Small tensors -> plain-JAX fast path (launch-overhead-bound regime).
    small_o = jax.random.normal(k1, (2, 4, 16, 16), dtype=jnp.float32)
    small_t = jax.random.normal(k2, (2, 4, 16, 16), dtype=jnp.float32)
    res_small = jax.block_until_ready(wrapper2(small_o, small_t))
    assert jnp.allclose(res_small["loss"], jnp.mean(jnp.abs(small_o - small_t)),
                        rtol=1e-5, atol=1e-6)

    # Ragged element count (not a multiple of 128) through the kernel path:
    # exercises the tail pad + in-kernel row masking.
    shape_r = (2, 3, 60, 60)   # 21600 elements
    xo = jax.random.normal(k3, shape_r, dtype=jnp.float32)
    xt = jax.random.normal(k4, shape_r, dtype=jnp.float32)
    res_r = jax.block_until_ready(wrapper2(xo, xt))
    assert jnp.allclose(res_r["loss"], jnp.mean(jnp.abs(xo - xt)),
                        rtol=1e-5, atol=1e-6)

    print("KERNEL_OK")
</pallas_src>

<mosaic_0001>
module attributes {stable_mosaic.version = 11 : i64} {
  func.func @_l1_sum_kernel(%arg0: i32, %arg1: i32, %arg2: memref<256x128xf32, #tpu.memory_space<vmem>>, %arg3: memref<256x128xf32, #tpu.memory_space<vmem>>, %arg4: memref<256x128xf32, #tpu.memory_space<vmem>>, %arg5: memref<256x128xf32, #tpu.memory_space<vmem>>, %arg6: memref<1x2xf32, #tpu.memory_space<smem>>, %arg7: memref<8x128xf32, #tpu.memory_space<vmem>>, %arg8: memref<8x128xf32, #tpu.memory_space<vmem>>) attributes {dimension_semantics = [#tpu.dimension_semantics<parallel>, #tpu.dimension_semantics<arbitrary>], iteration_bounds = array<i64: 1, 1>, scalar_prefetch = 0 : i64, scratch_operands = 2 : i64, tpu.core_type = #tpu.core_type<tc>, window_params = [{transform_indices = @transform_0, window_bounds = array<i64: 256, 128>}, {transform_indices = @transform_1, window_bounds = array<i64: 256, 128>}, {transform_indices = @transform_2, window_bounds = array<i64: 256, 128>}, {transform_indices = @transform_3, window_bounds = array<i64: 256, 128>}, {transform_indices = @transform_4, window_bounds = array<i64: 1, 2>}]} {
    %c0_i32 = arith.constant 0 : i32
    %0 = arith.cmpi eq, %arg1, %c0_i32 : i32
    %1 = arith.extui %0 : i1 to i32
    %c0_i32_0 = arith.constant 0 : i32
    %2 = arith.cmpi ne, %1, %c0_i32_0 : i32
    scf.if %2 {
      %cst_19 = arith.constant 0.000000e+00 : f32
      %24 = vector.broadcast %cst_19 : f32 to vector<8x128xf32>
      %c0_20 = arith.constant 0 : index
      %c0_21 = arith.constant 0 : index
      %25 = vector.load %arg7[%c0_20, %c0_21] : memref<8x128xf32, #tpu.memory_space<vmem>>, vector<8x128xf32>
      tpu.vector_store %arg7[%c0_20, %c0_21], %24 {strides = array<i32>} : memref<8x128xf32, #tpu.memory_space<vmem>>, vector<8x128xf32>,
      %cst_22 = arith.constant 0.000000e+00 : f32
      %26 = vector.broadcast %cst_22 : f32 to vector<8x128xf32>
      %c0_23 = arith.constant 0 : index
      %c0_24 = arith.constant 0 : index
      %27 = vector.load %arg8[%c0_23, %c0_24] : memref<8x128xf32, #tpu.memory_space<vmem>>, vector<8x128xf32>
      tpu.vector_store %arg8[%c0_23, %c0_24], %26 {strides = array<i32>} : memref<8x128xf32, #tpu.memory_space<vmem>>, vector<8x128xf32>,
    } else {
    }
    %c0 = arith.constant 0 : index
    %c0_1 = arith.constant 0 : index
    %3 = vector.load %arg2[%c0, %c0_1] : memref<256x128xf32, #tpu.memory_space<vmem>>, vector<256x128xf32>
    %c0_2 = arith.constant 0 : index
    %c0_3 = arith.constant 0 : index
    %4 = vector.load %arg3[%c0_2, %c0_3] : memref<256x128xf32, #tpu.memory_space<vmem>>, vector<256x128xf32>
    %5 = arith.subf %3, %4 : vector<256x128xf32>
    %6 = math.absf %5 : vector<256x128xf32>
    %c0_4 = arith.constant 0 : index
    %c0_5 = arith.constant 0 : index
    %7 = vector.load %arg7[%c0_4, %c0_5] : memref<8x128xf32, #tpu.memory_space<vmem>>, vector<8x128xf32>
    %8 = vector.shape_cast %6 : vector<256x128xf32> to vector<32x8x128xf32>
    %cst = arith.constant dense<0.000000e+00> : vector<8x128xf32>
    %9 = vector.multi_reduction <add>, %8, %cst [0] : vector<32x8x128xf32> to vector<8x128xf32>
    %10 = arith.addf %7, %9 : vector<8x128xf32>
    %c0_6 = arith.constant 0 : index
    %c0_7 = arith.constant 0 : index
    %11 = vector.load %arg7[%c0_6, %c0_7] : memref<8x128xf32, #tpu.memory_space<vmem>>, vector<8x128xf32>
    tpu.vector_store %arg7[%c0_6, %c0_7], %10 {strides = array<i32>} : memref<8x128xf32, #tpu.memory_space<vmem>>, vector<8x128xf32>,
    %c0_8 = arith.constant 0 : index
    %c0_9 = arith.constant 0 : index
    %12 = vector.load %arg4[%c0_8, %c0_9] : memref<256x128xf32, #tpu.memory_space<vmem>>, vector<256x128xf32>
    %c0_10 = arith.constant 0 : index
    %c0_11 = arith.constant 0 : index
    %13 = vector.load %arg5[%c0_10, %c0_11] : memref<256x128xf32, #tpu.memory_space<vmem>>, vector<256x128xf32>
    %14 = arith.subf %12, %13 : vector<256x128xf32>
    %15 = math.absf %14 : vector<256x128xf32>
    %c0_12 = arith.constant 0 : index
    %c0_13 = arith.constant 0 : index
    %16 = vector.load %arg8[%c0_12, %c0_13] : memref<8x128xf32, #tpu.memory_space<vmem>>, vector<8x128xf32>
    %17 = vector.shape_cast %15 : vector<256x128xf32> to vector<32x8x128xf32>
    %cst_14 = arith.constant dense<0.000000e+00> : vector<8x128xf32>
    %18 = vector.multi_reduction <add>, %17, %cst_14 [0] : vector<32x8x128xf32> to vector<8x128xf32>
    %19 = arith.addf %16, %18 : vector<8x128xf32>
    %c0_15 = arith.constant 0 : index
    %c0_16 = arith.constant 0 : index
    %20 = vector.load %arg8[%c0_15, %c0_16] : memref<8x128xf32, #tpu.memory_space<vmem>>, vector<8x128xf32>
    tpu.vector_store %arg8[%c0_15, %c0_16], %19 {strides = array<i32>} : memref<8x128xf32, #tpu.memory_space<vmem>>, vector<8x128xf32>,
    %c0_i32_17 = arith.constant 0 : i32
    %21 = arith.cmpi eq, %arg1, %c0_i32_17 : i32
    %22 = arith.extui %21 : i1 to i32
    %c0_i32_18 = arith.constant 0 : i32
    %23 = arith.cmpi ne, %22, %c0_i32_18 : i32
    scf.if %23 {
      %c0_19 = arith.constant 0 : index
      %c0_20 = arith.constant 0 : index
      %24 = vector.load %arg7[%c0_19, %c0_20] : memref<8x128xf32, #tpu.memory_space<vmem>>, vector<8x128xf32>
      %25 = vector.shape_cast %24 : vector<8x128xf32> to vector<1x8x128xf32>
      %cst_21 = arith.constant dense<0.000000e+00> : vector<1xf32>
      %26 = vector.multi_reduction <add>, %25, %cst_21 [1, 2] : vector<1x8x128xf32> to vector<1xf32>
      %27 = vector.shape_cast %26 : vector<1xf32> to vector<1x1x1xf32>
      %28 = vector.extract %27[0, 0, 0] : f32 from vector<1x1x1xf32>
      %c0_22 = arith.constant 0 : index
      %c0_23 = arith.constant 0 : index
      %29 = memref.load %arg6[%c0_22, %c0_23] : memref<1x2xf32, #tpu.memory_space<smem>>
      memref.store %28, %arg6[%c0_22, %c0_23] : memref<1x2xf32, #tpu.memory_space<smem>>
      %c0_24 = arith.constant 0 : index
      %c0_25 = arith.constant 0 : index
      %30 = vector.load %arg8[%c0_24, %c0_25] : memref<8x128xf32, #tpu.memory_space<vmem>>, vector<8x128xf32>
      %31 = vector.shape_cast %30 : vector<8x128xf32> to vector<1x8x128xf32>
      %cst_26 = arith.constant dense<0.000000e+00> : vector<1xf32>
      %32 = vector.multi_reduction <add>, %31, %cst_26 [1, 2] : vector<1x8x128xf32> to vector<1xf32>
      %33 = vector.shape_cast %32 : vector<1xf32> to vector<1x1x1xf32>
      %34 = vector.extract %33[0, 0, 0] : f32 from vector<1x1x1xf32>
      %c0_27 = arith.constant 0 : index
      %c1 = arith.constant 1 : index
      %35 = memref.load %arg6[%c0_27, %c1] : memref<1x2xf32, #tpu.memory_space<smem>>
      memref.store %34, %arg6[%c0_27, %c1] : memref<1x2xf32, #tpu.memory_space<smem>>
    } else {
    }
    return
  }
  func.func @transform_0(%arg0: i32, %arg1: i32) -> (i32, i32) {
    %c1_i32 = arith.constant 1 : i32
    %0 = arith.muli %arg0, %c1_i32 : i32
    %1 = arith.addi %0, %arg1 : i32
    %c0_i32 = arith.constant 0 : i32
    %c0_i32_0 = arith.constant 0 : i32
    return %1, %c0_i32 : i32, i32
  }
  func.func @transform_1(%arg0: i32, %arg1: i32) -> (i32, i32) {
    %c1_i32 = arith.constant 1 : i32
    %0 = arith.muli %arg0, %c1_i32 : i32
    %1 = arith.addi %0, %arg1 : i32
    %c0_i32 = arith.constant 0 : i32
    %c0_i32_0 = arith.constant 0 : i32
    return %1, %c0_i32 : i32, i32
  }
  func.func @transform_2(%arg0: i32, %arg1: i32) -> (i32, i32) {
    %c1_i32 = arith.constant 1 : i32
    %0 = arith.muli %arg0, %c1_i32 : i32
    %1 = arith.addi %0, %arg1 : i32
    %c0_i32 = arith.constant 0 : i32
    %c0_i32_0 = arith.constant 0 : i32
    return %1, %c0_i32 : i32, i32
  }
  func.func @transform_3(%arg0: i32, %arg1: i32) -> (i32, i32) {
    %c1_i32 = arith.constant 1 : i32
    %0 = arith.muli %arg0, %c1_i32 : i32
    %1 = arith.addi %0, %arg1 : i32
    %c0_i32 = arith.constant 0 : i32
    %c0_i32_0 = arith.constant 0 : i32
    return %1, %c0_i32 : i32, i32
  }
  func.func @transform_4(%arg0: i32, %arg1: i32) -> (i32, i32) {
    %c0_i32 = arith.constant 0 : i32
    %c0_i32_0 = arith.constant 0 : i32
    return %arg0, %c0_i32 : i32, i32
  }
}

</mosaic_0001>

<llo_original>
// kernel: a_call__.1
$region0: #{a_call__.1}
  #allocation0 [shape = 'u32[]', space=smem, size = 0x4, offset = 0x4, fixed_abs, tag = 'smem constant byte address 0x4 - core index']
  #allocation1 [shape = 'u32[144,128]{1,0:T(1,128)}', space=vmem, size = 0x12000, scoped, tag = 'internal scratch']
  #allocation2 [shape = 'f32[8,128]{1,0:T(8,128)}', space=vmem, size = 0x1000, scoped, tag = 'scratch operand']
  #allocation3 [shape = 'f32[8,128]{1,0:T(8,128)}', space=vmem, size = 0x1000, scoped, tag = 'scratch operand']
  %s0 = inlined_call_operand.vmem [shape: f32[256,128], index: 0, kind: input, shape index: {}]
  %s1 = inlined_call_operand.vmem [shape: f32[256,128], index: 1, kind: input, shape index: {}]
  %s2 = inlined_call_operand.vmem [shape: f32[256,128], index: 2, kind: input, shape index: {}]
  %s3 = inlined_call_operand.vmem [shape: f32[256,128], index: 3, kind: input, shape index: {}]
  %s4 = inlined_call_operand.vmem [shape: f32[1,2], index: 4, kind: output, shape index: {}]
  %s5 = sld [smem:[#allocation0]]
  $region34: #{a_call__.1} parent=0
    _
  %s7 = ssub.s32 1, %s5
  %s8 = scalar_select 0, %s7, %s5
  $region1: #{a_call__.1} parent=0
    #allocation4 [shape = 'u8[512]{0}', space=smem, size = 0x200, scoped, tag = 'output window, operand 0, single buffered']
    #allocation5 [shape = 's32[1]{0}', space=sflag, size = 0x4, scoped, tag = 'scoped memory for a_call__.1']
    %9 = vsyncpa [#allocation5], 0
    // Predicated region
    $region2: #{a_call__.1} parent=1 // pred_check
      _
    $region3: #{a_call__.1} parent=1 // pred_check_branch
      %11 = sbr.rel (0) target = $region5
    $region4: #{a_call__.1} parent=1 // pred_region
      %s12 = sadd.s32 0, 0
      %s13 = smul.u32 32, %s12
      %p14 = scmp.lt.s32.totalorder %s13, 31
      %s15 = scalar_select %p14, %s13, 31
      %s16 = smul.addr %s15, 8
      %s17 = scalar_lea.vmem %s0, %s16
      %s18 = sadd.s32 0, 0
      %s19 = smul.u32 32, %s18
    $region5: #{a_call__.1} parent=1 // pred_fallthru
      _
    // Predicated region
    $region6: #{a_call__.1} parent=1 // pred_check
      _
    $region7: #{a_call__.1} parent=1 // pred_check_branch
      %21 = sbr.rel (0) target = $region9
    $region8: #{a_call__.1} parent=1 // pred_region
      %s22 = sadd.s32 0, 0
      %s23 = smul.u32 32, %s22
      %p24 = scmp.lt.s32.totalorder %s23, 31
      %s25 = scalar_select %p24, %s23, 31
      %s26 = smul.addr %s25, 8
      %s27 = scalar_lea.vmem %s1, %s26
      %s28 = sadd.s32 0, 0
      %s29 = smul.u32 32, %s28
    $region9: #{a_call__.1} parent=1 // pred_fallthru
      _
    // Predicated region
    $region10: #{a_call__.1} parent=1 // pred_check
      _
    $region11: #{a_call__.1} parent=1 // pred_check_branch
      %31 = sbr.rel (0) target = $region13
    $region12: #{a_call__.1} parent=1 // pred_region
      %s32 = sadd.s32 0, 0
      %s33 = smul.u32 32, %s32
      %p34 = scmp.lt.s32.totalorder %s33, 31
      %s35 = scalar_select %p34, %s33, 31
      %s36 = smul.addr %s35, 8
      %s37 = scalar_lea.vmem %s2, %s36
      %s38 = sadd.s32 0, 0
      %s39 = smul.u32 32, %s38
    $region13: #{a_call__.1} parent=1 // pred_fallthru
      _
    // Predicated region
    $region14: #{a_call__.1} parent=1 // pred_check
      _
    $region15: #{a_call__.1} parent=1 // pred_check_branch
      %41 = sbr.rel (0) target = $region17
    $region16: #{a_call__.1} parent=1 // pred_region
      %s42 = sadd.s32 0, 0
      %s43 = smul.u32 32, %s42
      %p44 = scmp.lt.s32.totalorder %s43, 31
      %s45 = scalar_select %p44, %s43, 31
      %s46 = smul.addr %s45, 8
      %s47 = scalar_lea.vmem %s3, %s46
      %s48 = sadd.s32 0, 0
      %s49 = smul.u32 32, %s48
    $region17: #{a_call__.1} parent=1 // pred_fallthru
      _
    %s50 = sadd.s32 0, 0
    %s51 = smul.u32 32, %s50
    %p52 = scmp.lt.s32.totalorder %s51, 31
    %s53 = scalar_select %p52, %s51, 31
    %s54 = smul.addr %s53, 8
    %s55 = scalar_lea.vmem %s0, %s54
    %s56 = sadd.s32 0, 0
    %s57 = smul.u32 32, %s56
    %p58 = scmp.lt.s32.totalorder %s57, 31
    %s59 = scalar_select %p58, %s57, 31
    %s60 = smul.addr %s59, 8
    %s61 = scalar_lea.vmem %s1, %s60
    %s62 = sadd.s32 0, 0
    %s63 = smul.u32 32, %s62
    %p64 = scmp.lt.s32.totalorder %s63, 31
    %s65 = scalar_select %p64, %s63, 31
    %s66 = smul.addr %s65, 8
    %s67 = scalar_lea.vmem %s2, %s66
    %s68 = sadd.s32 0, 0
    %s69 = smul.u32 32, %s68
    %p70 = scmp.lt.s32.totalorder %s69, 31
    %s71 = scalar_select %p70, %s69, 31
    %s72 = smul.addr %s71, 8
    %s73 = scalar_lea.vmem %s3, %s72
    %s74 = sadd.s32 0, 0
    %s75 = smul.u32 32, %s74
    %p76 = scmp.lt.s32.totalorder %s75, 31
    %s77 = scalar_select %p76, %s75, 31
    %s78 = smul.addr %s77, 8
    %s79 = scalar_lea.vmem %s0, %s78
    %s80 = sadd.s32 0, 0
    %s81 = smul.u32 32, %s80
    %s82 = sadd.s32 0, 0
    %s83 = smul.u32 32, %s82
    %p84 = scmp.lt.s32.totalorder %s83, 31
    %s85 = scalar_select %p84, %s83, 31
    %s86 = smul.addr %s85, 8
    %s87 = scalar_lea.vmem %s1, %s86
    %s88 = sadd.s32 0, 0
    %s89 = smul.u32 32, %s88
    %s90 = sadd.s32 0, 0
    %s91 = smul.u32 32, %s90
    %p92 = scmp.lt.s32.totalorder %s91, 31
    %s93 = scalar_select %p92, %s91, 31
    %s94 = smul.addr %s93, 8
    %s95 = scalar_lea.vmem %s2, %s94
    %s96 = sadd.s32 0, 0
    %s97 = smul.u32 32, %s96
    %s98 = sadd.s32 0, 0
    %s99 = smul.u32 32, %s98
    %p100 = scmp.lt.s32.totalorder %s99, 31
    %s101 = scalar_select %p100, %s99, 31
    %s102 = smul.addr %s101, 8
    %s103 = scalar_lea.vmem %s3, %s102
    %s104 = sadd.s32 0, 0
    %s105 = smul.u32 32, %s104
    %p106 = scmp.eq.s32.totalorder 0, 0
    // Predicated region
    $region18: #{a_call__.1} parent=1 // pred_check
      %p107 = pneg %p106
    $region19: #{a_call__.1} parent=1 // pred_check_branch
      %109 = sbr.rel (%p107) target = $region21
    $region20: #{a_call__.1} parent=1 // pred_region
      %110 = vst [vmem:[#allocation2] sm:$0xff] 0.0
      %111 = vst [vmem:[#allocation3] sm:$0xff] 0.0
    $region21: #{a_call__.1} parent=1 // pred_fallthru
      _
    %v112 = vld [vmem:[%s79] sm:$0xff]
    %v113 = vld [vmem:[%s79 + $0x8] sm:$0xff]
    %v114 = vld [vmem:[%s79 + $0x10] sm:$0xff]
    %v115 = vld [vmem:[%s79 + $0x18] sm:$0xff]
    %v116 = vld [vmem:[%s79 + $0x20] sm:$0xff]
    %v117 = vld [vmem:[%s79 + $0x28] sm:$0xff]
    %v118 = vld [vmem:[%s79 + $0x30] sm:$0xff]
    %v119 = vld [vmem:[%s79 + $0x38] sm:$0xff]
    %v120 = vld [vmem:[%s79 + $0x40] sm:$0xff]
    %v121 = vld [vmem:[%s79 + $0x48] sm:$0xff]
    %v122 = vld [vmem:[%s79 + $0x50] sm:$0xff]
    %v123 = vld [vmem:[%s79 + $0x58] sm:$0xff]
    %v124 = vld [vmem:[%s79 + $0x60] sm:$0xff]
    %v125 = vld [vmem:[%s79 + $0x68] sm:$0xff]
    %v126 = vld [vmem:[%s79 + $0x70] sm:$0xff]
    %v127 = vld [vmem:[%s79 + $0x78] sm:$0xff]
    %v128 = vld [vmem:[%s79 + $0x80] sm:$0xff]
    %v129 = vld [vmem:[%s79 + $0x88] sm:$0xff]
    %v130 = vld [vmem:[%s79 + $0x90] sm:$0xff]
    %v131 = vld [vmem:[%s79 + $0x98] sm:$0xff]
    %v132 = vld [vmem:[%s79 + $0xa0] sm:$0xff]
    %v133 = vld [vmem:[%s79 + $0xa8] sm:$0xff]
    %v134 = vld [vmem:[%s79 + $0xb0] sm:$0xff]
    %v135 = vld [vmem:[%s79 + $0xb8] sm:$0xff]
    %v136 = vld [vmem:[%s79 + $0xc0] sm:$0xff]
    %v137 = vld [vmem:[%s79 + $0xc8] sm:$0xff]
    %v138 = vld [vmem:[%s79 + $0xd0] sm:$0xff]
    %v139 = vld [vmem:[%s79 + $0xd8] sm:$0xff]
    %v140 = vld [vmem:[%s79 + $0xe0] sm:$0xff]
    %v141 = vld [vmem:[%s79 + $0xe8] sm:$0xff]
    %v142 = vld [vmem:[%s79 + $0xf0] sm:$0xff]
    %v143 = vld [vmem:[%s79 + $0xf8] sm:$0xff]
    %v144 = vld [vmem:[%s87] sm:$0xff]
    %v145 = vld [vmem:[%s87 + $0x8] sm:$0xff]
    %v146 = vld [vmem:[%s87 + $0x10] sm:$0xff]
    %v147 = vld [vmem:[%s87 + $0x18] sm:$0xff]
    %v148 = vld [vmem:[%s87 + $0x20] sm:$0xff]
    %v149 = vld [vmem:[%s87 + $0x28] sm:$0xff]
    %v150 = vld [vmem:[%s87 + $0x30] sm:$0xff]
    %v151 = vld [vmem:[%s87 + $0x38] sm:$0xff]
    %v152 = vld [vmem:[%s87 + $0x40] sm:$0xff]
    %v153 = vld [vmem:[%s87 + $0x48] sm:$0xff]
    %v154 = vld [vmem:[%s87 + $0x50] sm:$0xff]
    %v155 = vld [vmem:[%s87 + $0x58] sm:$0xff]
    %v156 = vld [vmem:[%s87 + $0x60] sm:$0xff]
    %v157 = vld [vmem:[%s87 + $0x68] sm:$0xff]
    %v158 = vld [vmem:[%s87 + $0x70] sm:$0xff]
    %v159 = vld [vmem:[%s87 + $0x78] sm:$0xff]
    %v160 = vld [vmem:[%s87 + $0x80] sm:$0xff]
    %v161 = vld [vmem:[%s87 + $0x88] sm:$0xff]
    %v162 = vld [vmem:[%s87 + $0x90] sm:$0xff]
    %v163 = vld [vmem:[%s87 + $0x98] sm:$0xff]
    %v164 = vld [vmem:[%s87 + $0xa0] sm:$0xff]
    %v165 = vld [vmem:[%s87 + $0xa8] sm:$0xff]
    %v166 = vld [vmem:[%s87 + $0xb0] sm:$0xff]
    %v167 = vld [vmem:[%s87 + $0xb8] sm:$0xff]
    %v168 = vld [vmem:[%s87 + $0xc0] sm:$0xff]
    %v169 = vld [vmem:[%s87 + $0xc8] sm:$0xff]
    %v170 = vld [vmem:[%s87 + $0xd0] sm:$0xff]
    %v171 = vld [vmem:[%s87 + $0xd8] sm:$0xff]
    %v172 = vld [vmem:[%s87 + $0xe0] sm:$0xff]
    %v173 = vld [vmem:[%s87 + $0xe8] sm:$0xff]
    %v174 = vld [vmem:[%s87 + $0xf0] sm:$0xff]
    %v175 = vld [vmem:[%s87 + $0xf8] sm:$0xff]
    %v176 = vsub.f32 %v112, %v144
    %v177 = vsub.f32 %v113, %v145
    %v178 = vsub.f32 %v114, %v146
    %v179 = vsub.f32 %v115, %v147
    %v180 = vsub.f32 %v116, %v148
    %v181 = vsub.f32 %v117, %v149
    %v182 = vsub.f32 %v118, %v150
    %v183 = vsub.f32 %v119, %v151
    %v184 = vsub.f32 %v120, %v152
    %v185 = vsub.f32 %v121, %v153
    %v186 = vsub.f32 %v122, %v154
    %v187 = vsub.f32 %v123, %v155
    %v188 = vsub.f32 %v124, %v156
    %v189 = vsub.f32 %v125, %v157
    %v190 = vsub.f32 %v126, %v158
    %v191 = vsub.f32 %v127, %v159
    %v192 = vsub.f32 %v128, %v160
    %v193 = vsub.f32 %v129, %v161
    %v194 = vsub.f32 %v130, %v162
    %v195 = vsub.f32 %v131, %v163
    %v196 = vsub.f32 %v132, %v164
    %v197 = vsub.f32 %v133, %v165
    %v198 = vsub.f32 %v134, %v166
    %v199 = vsub.f32 %v135, %v167
    %v200 = vsub.f32 %v136, %v168
    %v201 = vsub.f32 %v137, %v169
    %v202 = vsub.f32 %v138, %v170
    %v203 = vsub.f32 %v139, %v171
    %v204 = vsub.f32 %v140, %v172
    %v205 = vsub.f32 %v141, %v173
    %v206 = vsub.f32 %v142, %v174
    %v207 = vsub.f32 %v143, %v175
    %v208 = vand.u32 2147483647, %v176
    %v209 = vand.u32 2147483647, %v177
    %v210 = vand.u32 2147483647, %v178
    %v211 = vand.u32 2147483647, %v179
    %v212 = vand.u32 2147483647, %v180
    %v213 = vand.u32 2147483647, %v181
    %v214 = vand.u32 2147483647, %v182
    %v215 = vand.u32 2147483647, %v183
    %v216 = vand.u32 2147483647, %v184
    %v217 = vand.u32 2147483647, %v185
    %v218 = vand.u32 2147483647, %v186
    %v219 = vand.u32 2147483647, %v187
    %v220 = vand.u32 2147483647, %v188
    %v221 = vand.u32 2147483647, %v189
    %v222 = vand.u32 2147483647, %v190
    %v223 = vand.u32 2147483647, %v191
    %v224 = vand.u32 2147483647, %v192
    %v225 = vand.u32 2147483647, %v193
    %v226 = vand.u32 2147483647, %v194
    %v227 = vand.u32 2147483647, %v195
    %v228 = vand.u32 2147483647, %v196
    %v229 = vand.u32 2147483647, %v197
    %v230 = vand.u32 2147483647, %v198
    %v231 = vand.u32 2147483647, %v199
    %v232 = vand.u32 2147483647, %v200
    %v233 = vand.u32 2147483647, %v201
    %v234 = vand.u32 2147483647, %v202
    %v235 = vand.u32 2147483647, %v203
    %v236 = vand.u32 2147483647, %v204
    %v237 = vand.u32 2147483647, %v205
    %v238 = vand.u32 2147483647, %v206
    %v239 = vand.u32 2147483647, %v207
    %v240 = vld [vmem:[#allocation2] sm:$0xff]
    %v241 = vadd.f32 %v208, %v209
    %v242 = vadd.f32 %v241, %v210
    %v243 = vadd.f32 %v242, %v211
    %v244 = vadd.f32 %v243, %v212
    %v245 = vadd.f32 %v244, %v213
    %v246 = vadd.f32 %v245, %v214
    %v247 = vadd.f32 %v246, %v215
    %v248 = vadd.f32 %v247, %v216
    %v249 = vadd.f32 %v248, %v217
    %v250 = vadd.f32 %v249, %v218
    %v251 = vadd.f32 %v250, %v219
    %v252 = vadd.f32 %v251, %v220
    %v253 = vadd.f32 %v252, %v221
    %v254 = vadd.f32 %v253, %v222
    %v255 = vadd.f32 %v254, %v223
    %v256 = vadd.f32 %v255, %v224
    %v257 = vadd.f32 %v256, %v225
    %v258 = vadd.f32 %v257, %v226
    %v259 = vadd.f32 %v258, %v227
    %v260 = vadd.f32 %v259, %v228
    %v261 = vadd.f32 %v260, %v229
    %v262 = vadd.f32 %v261, %v230
    %v263 = vadd.f32 %v262, %v231
    %v264 = vadd.f32 %v263, %v232
    %v265 = vadd.f32 %v264, %v233
    %v266 = vadd.f32 %v265, %v234
    %v267 = vadd.f32 %v266, %v235
    %v268 = vadd.f32 %v267, %v236
    %v269 = vadd.f32 %v268, %v237
    %v270 = vadd.f32 %v269, %v238
    %v271 = vadd.f32 %v270, %v239
    %v272 = vadd.f32 %v240, %v271
    %273 = vst [vmem:[#allocation2] sm:$0xff] %v272
    %v274 = vld [vmem:[%s95] sm:$0xff]
    %v275 = vld [vmem:[%s95 + $0x8] sm:$0xff]
    %v276 = vld [vmem:[%s95 + $0x10] sm:$0xff]
    %v277 = vld [vmem:[%s95 + $0x18] sm:$0xff]
    %v278 = vld [vmem:[%s95 + $0x20] sm:$0xff]
    %v279 = vld [vmem:[%s95 + $0x28] sm:$0xff]
    %v280 = vld [vmem:[%s95 + $0x30] sm:$0xff]
    %v281 = vld [vmem:[%s95 + $0x38] sm:$0xff]
    %v282 = vld [vmem:[%s95 + $0x40] sm:$0xff]
    %v283 = vld [vmem:[%s95 + $0x48] sm:$0xff]
    %v284 = vld [vmem:[%s95 + $0x50] sm:$0xff]
    %v285 = vld [vmem:[%s95 + $0x58] sm:$0xff]
    %v286 = vld [vmem:[%s95 + $0x60] sm:$0xff]
    %v287 = vld [vmem:[%s95 + $0x68] sm:$0xff]
    %v288 = vld [vmem:[%s95 + $0x70] sm:$0xff]
    %v289 = vld [vmem:[%s95 + $0x78] sm:$0xff]
    %v290 = vld [vmem:[%s95 + $0x80] sm:$0xff]
    %v291 = vld [vmem:[%s95 + $0x88] sm:$0xff]
    %v292 = vld [vmem:[%s95 + $0x90] sm:$0xff]
    %v293 = vld [vmem:[%s95 + $0x98] sm:$0xff]
    %v294 = vld [vmem:[%s95 + $0xa0] sm:$0xff]
    %v295 = vld [vmem:[%s95 + $0xa8] sm:$0xff]
    %v296 = vld [vmem:[%s95 + $0xb0] sm:$0xff]
    %v297 = vld [vmem:[%s95 + $0xb8] sm:$0xff]
    %v298 = vld [vmem:[%s95 + $0xc0] sm:$0xff]
    %v299 = vld [vmem:[%s95 + $0xc8] sm:$0xff]
    %v300 = vld [vmem:[%s95 + $0xd0] sm:$0xff]
    %v301 = vld [vmem:[%s95 + $0xd8] sm:$0xff]
    %v302 = vld [vmem:[%s95 + $0xe0] sm:$0xff]
    %v303 = vld [vmem:[%s95 + $0xe8] sm:$0xff]
    %v304 = vld [vmem:[%s95 + $0xf0] sm:$0xff]
    %v305 = vld [vmem:[%s95 + $0xf8] sm:$0xff]
    %v306 = vld [vmem:[%s103] sm:$0xff]
    %v307 = vld [vmem:[%s103 + $0x8] sm:$0xff]
    %v308 = vld [vmem:[%s103 + $0x10] sm:$0xff]
    %v309 = vld [vmem:[%s103 + $0x18] sm:$0xff]
    %v310 = vld [vmem:[%s103 + $0x20] sm:$0xff]
    %v311 = vld [vmem:[%s103 + $0x28] sm:$0xff]
    %v312 = vld [vmem:[%s103 + $0x30] sm:$0xff]
    %v313 = vld [vmem:[%s103 + $0x38] sm:$0xff]
    %v314 = vld [vmem:[%s103 + $0x40] sm:$0xff]
    %v315 = vld [vmem:[%s103 + $0x48] sm:$0xff]
    %v316 = vld [vmem:[%s103 + $0x50] sm:$0xff]
    %v317 = vld [vmem:[%s103 + $0x58] sm:$0xff]
    %v318 = vld [vmem:[%s103 + $0x60] sm:$0xff]
    %v319 = vld [vmem:[%s103 + $0x68] sm:$0xff]
    %v320 = vld [vmem:[%s103 + $0x70] sm:$0xff]
    %v321 = vld [vmem:[%s103 + $0x78] sm:$0xff]
    %v322 = vld [vmem:[%s103 + $0x80] sm:$0xff]
    %v323 = vld [vmem:[%s103 + $0x88] sm:$0xff]
    %v324 = vld [vmem:[%s103 + $0x90] sm:$0xff]
    %v325 = vld [vmem:[%s103 + $0x98] sm:$0xff]
    %v326 = vld [vmem:[%s103 + $0xa0] sm:$0xff]
    %v327 = vld [vmem:[%s103 + $0xa8] sm:$0xff]
    %v328 = vld [vmem:[%s103 + $0xb0] sm:$0xff]
    %v329 = vld [vmem:[%s103 + $0xb8] sm:$0xff]
    %v330 = vld [vmem:[%s103 + $0xc0] sm:$0xff]
    %v331 = vld [vmem:[%s103 + $0xc8] sm:$0xff]
    %v332 = vld [vmem:[%s103 + $0xd0] sm:$0xff]
    %v333 = vld [vmem:[%s103 + $0xd8] sm:$0xff]
    %v334 = vld [vmem:[%s103 + $0xe0] sm:$0xff]
    %v335 = vld [vmem:[%s103 + $0xe8] sm:$0xff]
    %v336 = vld [vmem:[%s103 + $0xf0] sm:$0xff]
    %v337 = vld [vmem:[%s103 + $0xf8] sm:$0xff]
    %v338 = vsub.f32 %v274, %v306
    %v339 = vsub.f32 %v275, %v307
    %v340 = vsub.f32 %v276, %v308
    %v341 = vsub.f32 %v277, %v309
    %v342 = vsub.f32 %v278, %v310
    %v343 = vsub.f32 %v279, %v311
    %v344 = vsub.f32 %v280, %v312
    %v345 = vsub.f32 %v281, %v313
    %v346 = vsub.f32 %v282, %v314
    %v347 = vsub.f32 %v283, %v315
    %v348 = vsub.f32 %v284, %v316
    %v349 = vsub.f32 %v285, %v317
    %v350 = vsub.f32 %v286, %v318
    %v351 = vsub.f32 %v287, %v319
    %v352 = vsub.f32 %v288, %v320
    %v353 = vsub.f32 %v289, %v321
    %v354 = vsub.f32 %v290, %v322
    %v355 = vsub.f32 %v291, %v323
    %v356 = vsub.f32 %v292, %v324
    %v357 = vsub.f32 %v293, %v325
    %v358 = vsub.f32 %v294, %v326
    %v359 = vsub.f32 %v295, %v327
    %v360 = vsub.f32 %v296, %v328
    %v361 = vsub.f32 %v297, %v329
    %v362 = vsub.f32 %v298, %v330
    %v363 = vsub.f32 %v299, %v331
    %v364 = vsub.f32 %v300, %v332
    %v365 = vsub.f32 %v301, %v333
    %v366 = vsub.f32 %v302, %v334
    %v367 = vsub.f32 %v303, %v335
    %v368 = vsub.f32 %v304, %v336
    %v369 = vsub.f32 %v305, %v337
    %v370 = vand.u32 2147483647, %v338
    %v371 = vand.u32 2147483647, %v339
    %v372 = vand.u32 2147483647, %v340
    %v373 = vand.u32 2147483647, %v341
    %v374 = vand.u32 2147483647, %v342
    %v375 = vand.u32 2147483647, %v343
    %v376 = vand.u32 2147483647, %v344
    %v377 = vand.u32 2147483647, %v345
    %v378 = vand.u32 2147483647, %v346
    %v379 = vand.u32 2147483647, %v347
    %v380 = vand.u32 2147483647, %v348
    %v381 = vand.u32 2147483647, %v349
    %v382 = vand.u32 2147483647, %v350
    %v383 = vand.u32 2147483647, %v351
    %v384 = vand.u32 2147483647, %v352
    %v385 = vand.u32 2147483647, %v353
    %v386 = vand.u32 2147483647, %v354
    %v387 = vand.u32 2147483647, %v355
    %v388 = vand.u32 2147483647, %v356
    %v389 = vand.u32 2147483647, %v357
    %v390 = vand.u32 2147483647, %v358
    %v391 = vand.u32 2147483647, %v359
    %v392 = vand.u32 2147483647, %v360
    %v393 = vand.u32 2147483647, %v361
    %v394 = vand.u32 2147483647, %v362
    %v395 = vand.u32 2147483647, %v363
    %v396 = vand.u32 2147483647, %v364
    %v397 = vand.u32 2147483647, %v365
    %v398 = vand.u32 2147483647, %v366
    %v399 = vand.u32 2147483647, %v367
    %v400 = vand.u32 2147483647, %v368
    %v401 = vand.u32 2147483647, %v369
    %v402 = vld [vmem:[#allocation3] sm:$0xff]
    %v403 = vadd.f32 %v370, %v371
    %v404 = vadd.f32 %v403, %v372
    %v405 = vadd.f32 %v404, %v373
    %v406 = vadd.f32 %v405, %v374
    %v407 = vadd.f32 %v406, %v375
    %v408 = vadd.f32 %v407, %v376
    %v409 = vadd.f32 %v408, %v377
    %v410 = vadd.f32 %v409, %v378
    %v411 = vadd.f32 %v410, %v379
    %v412 = vadd.f32 %v411, %v380
    %v413 = vadd.f32 %v412, %v381
    %v414 = vadd.f32 %v413, %v382
    %v415 = vadd.f32 %v414, %v383
    %v416 = vadd.f32 %v415, %v384
    %v417 = vadd.f32 %v416, %v385
    %v418 = vadd.f32 %v417, %v386
    %v419 = vadd.f32 %v418, %v387
    %v420 = vadd.f32 %v419, %v388
    %v421 = vadd.f32 %v420, %v389
    %v422 = vadd.f32 %v421, %v390
    %v423 = vadd.f32 %v422, %v391
    %v424 = vadd.f32 %v423, %v392
    %v425 = vadd.f32 %v424, %v393
    %v426 = vadd.f32 %v425, %v394
    %v427 = vadd.f32 %v426, %v395
    %v428 = vadd.f32 %v427, %v396
    %v429 = vadd.f32 %v428, %v397
    %v430 = vadd.f32 %v429, %v398
    %v431 = vadd.f32 %v430, %v399
    %v432 = vadd.f32 %v431, %v400
    %v433 = vadd.f32 %v432, %v401
    %v434 = vadd.f32 %v402, %v433
    %435 = vst [vmem:[#allocation3] sm:$0xff] %v434
    // Predicated region
    $region22: #{a_call__.1} parent=1 // pred_check
      %p436 = pneg %p106
    $region23: #{a_call__.1} parent=1 // pred_check_branch
      %438 = sbr.rel (%p436) target = $region25
    $region24: #{a_call__.1} parent=1 // pred_region
      %v439 = vld [vmem:[#allocation2] sm:$0xff]
      %440 = vadd.xlane.f32.xlu0 %v439
      %v441 = vpop.xlane.xlu0 %440
      %v442 = vrot.slane %v441, 4
      %v443 = vadd.f32 %v441, %v442
      %v444 = vrot.slane %v443, 2
      %v445 = vadd.f32 %v443, %v444
      %v446 = vrot.slane %v445, 1
      %v447 = vadd.f32 %v445, %v446
      %s448 = vtos %v447
      %s449 = scalar_lea.smem [#allocation4], 0
      %450 = sst [smem:[%s449]] %s448
      %v451 = vld [vmem:[#allocation3] sm:$0xff]
      %452 = vadd.xlane.f32.xlu0 %v451
      %v453 = vpop.xlane.xlu0 %452
      %v454 = vrot.slane %v453, 4
      %v455 = vadd.f32 %v453, %v454
      %v456 = vrot.slane %v455, 2
      %v457 = vadd.f32 %v455, %v456
      %v458 = vrot.slane %v457, 1
      %v459 = vadd.f32 %v457, %v458
      %s460 = vtos %v459
      %s461 = scalar_lea.smem [#allocation4], 1
      %462 = sst [smem:[%s461]] %s460
    $region25: #{a_call__.1} parent=1 // pred_fallthru
      _
    // Predicated region
    $region26: #{a_call__.1} parent=1 // pred_check
      _
    $region27: #{a_call__.1} parent=1 // pred_check_branch
      %464 = sbr.rel (0) target = $region29
    $region28: #{a_call__.1} parent=1 // pred_region
      %s466 = ssub.s32 16, 16
      %467 = vsyncadd [#allocation5], %s466
      %s469 = sshll.u32 %s4, 4
      %s470 = int_to_ptr.vmem [resolvable:$true] %s469
      %472 = dma.smem_to_vmem [#allocation4], 16, %s470, [#allocation5]
    $region29: #{a_call__.1} parent=1 // pred_fallthru
      _
    // Predicated region
    $region30: #{a_call__.1} parent=1 // pred_check
      _
    $region31: #{a_call__.1} parent=1 // pred_check_branch
      %474 = sbr.rel (0) target = $region33
    $region32: #{a_call__.1} parent=1 // pred_region
      %475 = dma.done [#allocation5], 16
    $region33: #{a_call__.1} parent=1 // pred_fallthru
      _
    %476 = sfence
    %477 = vsyncpa [#allocation5], 1

</llo_original>
